<compile_context>
chip_gen: v6e
topology: v6e:2x2x1
jax: 0.10.0
libtpu: 0.0.40
codegen_flags: <defaults>
</compile_context>

<pallas_src>
import math

import jax
import jax.numpy as jnp
from jax.experimental import pallas as pl
from jax.experimental.pallas import tpu as pltpu

# ----- synthetic stand-ins for cfg.* -----
SEMANTIC_EMBEDDING_DIM = 4
IN_DIM = SEMANTIC_EMBEDDING_DIM + 1          # cfg.MODEL_SEMANTIC_EMBEDDING_DIM + 1
OUT_DIM = 8                                  # cfg.MODEL_HEAD_EMBEDDING_DIM
KERNEL_SIZE = 7
PAD = (KERNEL_SIZE - 1) // 2
BN_EPS = 1e-5

ROW_TILE = 512          # pixels per grid step (lane axis; multiple of 128)

# On v6e/v7x, setting this to jnp.bfloat16 halves MXU push cycles and patch
# bandwidth (accumulation stays f32 via preferred_element_type).  Kept f32 by
# default so the self-test below matches the f32 reference at 1e-4 tolerance.
MXU_INPUT_DTYPE = jnp.float32


def _global_atten_kernel(patches_ref, w1t_ref, b1_ref, w2_ref, b2_ref, out_ref):
    """One lane-dense row tile (ROW_TILE pixels) per grid step.

    patches_ref : (KKC, T)    im2col patches, pixels on the lane axis
    w1t_ref     : (Cout, KKC) conv1 weight with BN scale folded, transposed
    b1_ref      : (Cout, 1)   conv1 bias with BN shift folded
    w2_ref      : (Cout, 1)   1x1 conv weight (column vector)
    b2_ref      : (1, 1)      conv2 bias (SMEM scalar)
    out_ref     : (1, T)      output row tile (lane-dense)
    """
    # conv1: a single MXU matmul with contraction depth KKC (=245).
    y = jnp.dot(w1t_ref[...], patches_ref[...],
                preferred_element_type=jnp.float32)            # (Cout, T)
    # folded bias/BN + ReLU: lane-dense VPU work on 4 full vregs.
    y = jnp.maximum(y + b1_ref[...], 0.0)
    # conv2 (1x1 -> 1 channel): broadcast-multiply + cross-sublane reduce (XLU).
    out = jnp.sum(y * w2_ref[...], axis=0, keepdims=True) + b2_ref[0, 0]
    out_ref[...] = out.astype(out_ref.dtype)


def global_atten_forward(x_nchw, w1, b1, gamma, beta, run_mean, run_var, w2, b2):
    """x_nchw: (N, Cin, H, W) f32 (PyTorch layout) -> (N, 1, H, W) f32."""
    N, Cin, H, W = x_nchw.shape
    K = KERNEL_SIZE
    Cout = w1.shape[3]
    KKC = K * K * Cin
    rows = N * H * W

    # ---- fold eval-mode BN + conv1 bias into the matmul weights (f32, O(Cout)) ----
    scale = gamma / jnp.sqrt(run_var + BN_EPS)
    shift = beta - run_mean * scale
    w1_mat = w1.reshape(KKC, Cout) * scale[None, :]            # BN scale folded
    b1_fold = b1 * scale + shift                               # BN shift folded
    w1t = jnp.transpose(w1_mat).astype(MXU_INPUT_DTYPE)        # (Cout, KKC)
    b1_col = b1_fold.reshape(Cout, 1).astype(jnp.float32)
    w2_col = w2.reshape(Cout, 1).astype(jnp.float32)
    b2_s = b2.reshape(1, 1).astype(jnp.float32)

    # ---- im2col (wrapper glue, not the hot path): (KKC, N*H*W) ----
    xpad = jnp.pad(x_nchw, ((0, 0), (0, 0), (PAD, PAD), (PAD, PAD)))
    taps = [xpad[:, :, kh:kh + H, kw:kw + W]                   # (N, Cin, H, W)
            for kh in range(K) for kw in range(K)]
    patches = jnp.stack(taps, axis=0)                          # (K*K, N, Cin, H, W)
    patches = jnp.transpose(patches, (0, 2, 1, 3, 4))          # (K*K, Cin, N, H, W)
    patches = patches.reshape(KKC, rows).astype(MXU_INPUT_DTYPE)

    # pad the pixel axis up to a multiple of the lane-dense row tile
    rows_p = ((rows + ROW_TILE - 1) // ROW_TILE) * ROW_TILE
    if rows_p != rows:
        patches = jnp.pad(patches, ((0, 0), (0, rows_p - rows)))

    out_flat = pl.pallas_call(
        _global_atten_kernel,
        out_shape=jax.ShapeDtypeStruct((1, rows_p), jnp.float32),
        grid=(rows_p // ROW_TILE,),
        in_specs=[
            pl.BlockSpec((KKC, ROW_TILE), lambda i: (0, i)),       # patches tile
            pl.BlockSpec((Cout, KKC), lambda i: (0, 0)),           # w1 (folded)^T
            pl.BlockSpec((Cout, 1), lambda i: (0, 0)),             # b1 (folded)
            pl.BlockSpec((Cout, 1), lambda i: (0, 0)),             # w2 column
            pl.BlockSpec(memory_space=pltpu.MemorySpace.SMEM),     # b2 scalar
        ],
        out_specs=pl.BlockSpec((1, ROW_TILE), lambda i: (0, i)),
        compiler_params=pltpu.CompilerParams(
            # parallel: shards row tiles across v7x's two TensorCores; no-op on
            # single-TC v5e/v6e.
            dimension_semantics=("parallel",)),
    )(patches, w1t, b1_col, w2_col, b2_s)

    # (1, rows_p) -> (N, 1, H, W) NCHW, matching the PyTorch module.
    return out_flat[0, :rows].reshape(N, 1, H, W)


def _reference(x_nchw, w1, b1, gamma, beta, run_mean, run_var, w2, b2):
    scale = gamma / jnp.sqrt(run_var + BN_EPS)
    shift = beta - run_mean * scale
    y = jax.lax.conv_general_dilated(
        x_nchw, w1, window_strides=(1, 1),
        padding=[(PAD, PAD), (PAD, PAD)],
        dimension_numbers=("NCHW", "HWIO", "NCHW")) + b1.reshape(1, -1, 1, 1)
    y = y * scale.reshape(1, -1, 1, 1) + shift.reshape(1, -1, 1, 1)
    y = jnp.maximum(y, 0.0)
    w2_4d = w2.reshape(1, 1, OUT_DIM, 1)
    out = jax.lax.conv_general_dilated(
        y, w2_4d, window_strides=(1, 1), padding="VALID",
        dimension_numbers=("NCHW", "HWIO", "NCHW")) + b2.reshape(1, 1, 1, 1)
    return out


def init_params(key):
    ks = jax.random.split(key, 8)
    # conv1: kaiming_normal_(mode='fan_out', nonlinearity='relu')
    std1 = math.sqrt(2.0 / (OUT_DIM * KERNEL_SIZE * KERNEL_SIZE))
    w1 = jax.random.normal(
        ks[0], (KERNEL_SIZE, KERNEL_SIZE, IN_DIM, OUT_DIM), jnp.float32) * std1
    bound1 = 1.0 / math.sqrt(IN_DIM * KERNEL_SIZE * KERNEL_SIZE)
    b1 = jax.random.uniform(ks[1], (OUT_DIM,), jnp.float32, -bound1, bound1)
    # conv2 (1x1): kaiming_normal_ fan_out = 1*1*1
    std2 = math.sqrt(2.0 / 1.0)
    w2 = jax.random.normal(ks[2], (OUT_DIM, 1), jnp.float32) * std2
    bound2 = 1.0 / math.sqrt(OUT_DIM)
    b2 = jax.random.uniform(ks[3], (1,), jnp.float32, -bound2, bound2)
    # eval-mode BN with non-trivial running stats to exercise the weight folding
    gamma = 1.0 + 0.1 * jax.random.normal(ks[4], (OUT_DIM,), jnp.float32)
    beta = 0.1 * jax.random.normal(ks[5], (OUT_DIM,), jnp.float32)
    run_mean = 0.1 * jax.random.normal(ks[6], (OUT_DIM,), jnp.float32)
    run_var = 1.0 + 0.1 * jnp.abs(jax.random.normal(ks[7], (OUT_DIM,), jnp.float32))
    return w1, b1, gamma, beta, run_mean, run_var, w2, b2


if __name__ == "__main__":
    key = jax.random.PRNGKey(0)
    kp, kx = jax.random.split(key)
    params = init_params(kp)

    # PyTorch-style NCHW input: (N=2, C=IN_DIM=5, H=16, W=16)
    x_nchw = jax.random.normal(kx, (2, IN_DIM, 16, 16), jnp.float32)

    out = jax.block_until_ready(global_atten_forward(x_nchw, *params))
    ref = jax.block_until_ready(_reference(x_nchw, *params))

    assert out.shape == (2, 1, 16, 16)
    assert jnp.allclose(out, ref, rtol=1e-4, atol=1e-4), (
        float(jnp.max(jnp.abs(out - ref))))

    print("KERNEL_OK")
</pallas_src>

<mosaic_0001>
module attributes {stable_mosaic.version = 11 : i64} {
  func.func @_global_atten_kernel(%arg0: i32, %arg1: memref<245x512xf32, #tpu.memory_space<vmem>>, %arg2: memref<8x245xf32, #tpu.memory_space<vmem>>, %arg3: memref<8x1xf32, #tpu.memory_space<vmem>>, %arg4: memref<8x1xf32, #tpu.memory_space<vmem>>, %arg5: memref<1x1xf32, #tpu.memory_space<smem>>, %arg6: memref<1x512xf32, #tpu.memory_space<vmem>>) attributes {dimension_semantics = [#tpu.dimension_semantics<parallel>], iteration_bounds = array<i64: 1>, scalar_prefetch = 0 : i64, scratch_operands = 0 : i64, tpu.core_type = #tpu.core_type<tc>, window_params = [{transform_indices = @transform_0, window_bounds = array<i64: 245, 512>}, {pipeline_mode = #tpu.pipeline_mode<synchronous>, transform_indices = @transform_1, window_bounds = array<i64: 8, 245>}, {pipeline_mode = #tpu.pipeline_mode<synchronous>, transform_indices = @transform_2, window_bounds = array<i64: 8, 1>}, {pipeline_mode = #tpu.pipeline_mode<synchronous>, transform_indices = @transform_3, window_bounds = array<i64: 8, 1>}, {transform_indices = @transform_4, window_bounds = array<i64: 1, 1>}, {transform_indices = @transform_5, window_bounds = array<i64: 1, 512>}]} {
    %c0 = arith.constant 0 : index
    %c0_0 = arith.constant 0 : index
    %0 = vector.load %arg2[%c0, %c0_0] : memref<8x245xf32, #tpu.memory_space<vmem>>, vector<8x245xf32>
    %c0_1 = arith.constant 0 : index
    %c0_2 = arith.constant 0 : index
    %1 = vector.load %arg1[%c0_1, %c0_2] : memref<245x512xf32, #tpu.memory_space<vmem>>, vector<245x512xf32>
    %cst = arith.constant dense<0.000000e+00> : vector<8x512xf32>
    %2 = tpu.matmul %0, %1, %cst {dimension_numbers = #tpu.dot_dimension_numbers<[1], [0], [0], [1], [0, 0, 1, 1], [], []>} : vector<8x245xf32>, vector<245x512xf32>, vector<8x512xf32> -> vector<8x512xf32>
    %c0_3 = arith.constant 0 : index
    %c0_4 = arith.constant 0 : index
    %3 = vector.load %arg3[%c0_3, %c0_4] : memref<8x1xf32, #tpu.memory_space<vmem>>, vector<8x1xf32>
    %4 = vector.broadcast %3 : vector<8x1xf32> to vector<8x512xf32>
    %5 = arith.addf %2, %4 : vector<8x512xf32>
    %cst_5 = arith.constant 0.000000e+00 : f32
    %6 = vector.broadcast %cst_5 : f32 to vector<8x512xf32>
    %7 = arith.maximumf %5, %6 : vector<8x512xf32>
    %c0_6 = arith.constant 0 : index
    %c0_7 = arith.constant 0 : index
    %8 = vector.load %arg4[%c0_6, %c0_7] : memref<8x1xf32, #tpu.memory_space<vmem>>, vector<8x1xf32>
    %9 = vector.broadcast %8 : vector<8x1xf32> to vector<8x512xf32>
    %10 = arith.mulf %7, %9 : vector<8x512xf32>
    %cst_8 = arith.constant dense<0.000000e+00> : vector<512xf32>
    %11 = vector.multi_reduction <add>, %10, %cst_8 [0] : vector<8x512xf32> to vector<512xf32>
    %12 = vector.shape_cast %11 : vector<512xf32> to vector<1x512xf32>
    %c0_9 = arith.constant 0 : index
    %c0_10 = arith.constant 0 : index
    %13 = memref.load %arg5[%c0_9, %c0_10] : memref<1x1xf32, #tpu.memory_space<smem>>
    %14 = vector.broadcast %13 : f32 to vector<1x512xf32>
    %15 = arith.addf %12, %14 : vector<1x512xf32>
    %c0_11 = arith.constant 0 : index
    %c0_12 = arith.constant 0 : index
    %16 = vector.load %arg6[%c0_11, %c0_12] : memref<1x512xf32, #tpu.memory_space<vmem>>, vector<1x512xf32>
    tpu.vector_store %arg6[%c0_11, %c0_12], %15 {strides = array<i32>} : memref<1x512xf32, #tpu.memory_space<vmem>>, vector<1x512xf32>,
    return
  }
  func.func @transform_0(%arg0: i32) -> (i32, i32) {
    %c0_i32 = arith.constant 0 : i32
    %c0_i32_0 = arith.constant 0 : i32
    return %c0_i32, %arg0 : i32, i32
  }
  func.func @transform_1(%arg0: i32) -> (i32, i32) {
    %c0_i32 = arith.constant 0 : i32
    %c0_i32_0 = arith.constant 0 : i32
    %c0_i32_1 = arith.constant 0 : i32
    return %c0_i32, %c0_i32_0 : i32, i32
  }
  func.func @transform_2(%arg0: i32) -> (i32, i32) {
    %c0_i32 = arith.constant 0 : i32
    %c0_i32_0 = arith.constant 0 : i32
    %c0_i32_1 = arith.constant 0 : i32
    return %c0_i32, %c0_i32_0 : i32, i32
  }
  func.func @transform_3(%arg0: i32) -> (i32, i32) {
    %c0_i32 = arith.constant 0 : i32
    %c0_i32_0 = arith.constant 0 : i32
    %c0_i32_1 = arith.constant 0 : i32
    return %c0_i32, %c0_i32_0 : i32, i32
  }
  func.func @transform_4(%arg0: i32) -> (i32, i32) {
    %c0_i32 = arith.constant 0 : i32
    %c0_i32_0 = arith.constant 0 : i32
    %c0_i32_1 = arith.constant 0 : i32
    return %c0_i32, %c0_i32_0 : i32, i32
  }
  func.func @transform_5(%arg0: i32) -> (i32, i32) {
    %c0_i32 = arith.constant 0 : i32
    %c0_i32_0 = arith.constant 0 : i32
    return %c0_i32, %arg0 : i32, i32
  }
}

</mosaic_0001>

<llo_original>
// kernel: tpu_custom_call.1
$region0: #{tpu_custom_call.1}
  #allocation0 [shape = 'u32[]', space=smem, size = 0x4, offset = 0x4, fixed_abs, tag = 'smem constant byte address 0x4 - core index']
  #allocation1 [shape = 'u32[144,128]{1,0:T(1,128)}', space=vmem, size = 0x12000, scoped, tag = 'internal scratch']
  #allocation2 [shape = 'f32[1,1]{1,0:T(1,128)S(6)}', space=smem, size = 0x200, scoped, tag = 'scoped memory for tpu_custom_call.1']
  %s0 = inlined_call_operand.hbm [shape: f32[245,512], index: 0, kind: input, shape index: {}]
  %s1 = inlined_call_operand.vmem [shape: f32[8,245], index: 1, kind: input, shape index: {}]
  %s2 = inlined_call_operand.vmem [shape: f32[8,1], index: 2, kind: input, shape index: {}]
  %s3 = inlined_call_operand.vmem [shape: f32[8,1], index: 3, kind: input, shape index: {}]
  %s4 = inlined_call_operand.<no memory space> [shape: f32[1,1], index: 4, kind: input, shape index: {}]
  %s5 = inlined_call_operand.hbm [shape: f32[1,512], index: 5, kind: output, shape index: {}]
  %s6 = sld [smem:[#allocation0]]
  $region34: #{tpu_custom_call.1} parent=0
    _
  %s8 = ssub.s32 1, %s6
  %s9 = scalar_select 0, %s8, %s6
  %10 = sst [smem:[#allocation2]] %s4
  $region1: #{tpu_custom_call.1} parent=0
    #allocation3 [shape = 'u8[507904]{0}', space=vmem, size = 0x7c000, scoped, tag = 'input window, operand 0, single buffered']
    #allocation4 [shape = 's32[1]{0}', space=sflag, size = 0x4, scoped, tag = 'scoped memory for tpu_custom_call.1']
    #allocation5 [shape = 's32[1]{0}', space=sflag, size = 0x4, scoped, tag = 'scoped memory for tpu_custom_call.1']
    #allocation6 [shape = 'u8[2048]{0}', space=vmem, size = 0x800, scoped, tag = 'output window, operand 0, single buffered']
    %11 = vsyncpa [#allocation4], 0
    %12 = vsyncpa [#allocation5], 0
    // Predicated region
    $region2: #{tpu_custom_call.1} parent=1 // pred_check
      _
    $region3: #{tpu_custom_call.1} parent=1 // pred_check_branch
      %14 = sbr.rel (0) target = $region5
    $region4: #{tpu_custom_call.1} parent=1 // pred_region
      %s16 = ssub.s32 15872, 15872
      %17 = vsyncadd [#allocation4], %s16
      %s18 = sshll.u32 [#allocation3], 4
      %s19 = int_to_ptr.vmem [resolvable:$true] %s18
      %24 = dma.hbm_to_vmem [thread:$0]  %s0, 15872, %s19, [#allocation4], 512, 512, 32
    $region5: #{tpu_custom_call.1} parent=1 // pred_fallthru
      _
    // Predicated region
    $region6: #{tpu_custom_call.1} parent=1 // pred_check
      _
    $region7: #{tpu_custom_call.1} parent=1 // pred_check_branch
      %26 = sbr.rel (0) target = $region9
    $region8: #{tpu_custom_call.1} parent=1 // pred_region
      _
    $region9: #{tpu_custom_call.1} parent=1 // pred_fallthru
      _
    // Predicated region
    $region10: #{tpu_custom_call.1} parent=1 // pred_check
      _
    $region11: #{tpu_custom_call.1} parent=1 // pred_check_branch
      %28 = sbr.rel (0) target = $region13
    $region12: #{tpu_custom_call.1} parent=1 // pred_region
      _
    $region13: #{tpu_custom_call.1} parent=1 // pred_fallthru
      _
    // Predicated region
    $region14: #{tpu_custom_call.1} parent=1 // pred_check
      _
    $region15: #{tpu_custom_call.1} parent=1 // pred_check_branch
      %30 = sbr.rel (0) target = $region17
    $region16: #{tpu_custom_call.1} parent=1 // pred_region
      _
    $region17: #{tpu_custom_call.1} parent=1 // pred_fallthru
      _
    // Predicated region
    $region18: #{tpu_custom_call.1} parent=1 // pred_check
      _
    $region19: #{tpu_custom_call.1} parent=1 // pred_check_branch
      %32 = sbr.rel (0) target = $region21
    $region20: #{tpu_custom_call.1} parent=1 // pred_region
      _
    $region21: #{tpu_custom_call.1} parent=1 // pred_fallthru
      _
    // Predicated region
    $region22: #{tpu_custom_call.1} parent=1 // pred_check
      _
    $region23: #{tpu_custom_call.1} parent=1 // pred_check_branch
      %34 = sbr.rel (0) target = $region25
    $region24: #{tpu_custom_call.1} parent=1 // pred_region
      %35 = dma.done [#allocation4], 15872
    $region25: #{tpu_custom_call.1} parent=1 // pred_fallthru
      _
    %v36 = vld [vmem:[%s1] sm:$0xff]
    %v37 = vld [vmem:[%s1 + $0x8] sm:$0xff]
    %v38 = vld [vmem:[#allocation3] sm:$0xff]
    %v39 = vld [vmem:[#allocation3 + $0x8] sm:$0xff]
    %v40 = vld [vmem:[#allocation3 + $0x10] sm:$0xff]
    %v41 = vld [vmem:[#allocation3 + $0x18] sm:$0xff]
    %v42 = vld [vmem:[#allocation3 + $0x20] sm:$0xff]
    %v43 = vld [vmem:[#allocation3 + $0x28] sm:$0xff]
    %v44 = vld [vmem:[#allocation3 + $0x30] sm:$0xff]
    %v45 = vld [vmem:[#allocation3 + $0x38] sm:$0xff]
    %v46 = vld [vmem:[#allocation3 + $0x40] sm:$0xff]
    %v47 = vld [vmem:[#allocation3 + $0x48] sm:$0xff]
    %v48 = vld [vmem:[#allocation3 + $0x50] sm:$0xff]
    %v49 = vld [vmem:[#allocation3 + $0x58] sm:$0xff]
    %v50 = vld [vmem:[#allocation3 + $0x60] sm:$0xff]
    %v51 = vld [vmem:[#allocation3 + $0x68] sm:$0xff]
    %v52 = vld [vmem:[#allocation3 + $0x70] sm:$0xff]
    %v53 = vld [vmem:[#allocation3 + $0x78] sm:$0xff]
    %v54 = vld [vmem:[#allocation3 + $0x80] sm:$0xff]
    %v55 = vld [vmem:[#allocation3 + $0x88] sm:$0xff]
    %v56 = vld [vmem:[#allocation3 + $0x90] sm:$0xff]
    %v57 = vld [vmem:[#allocation3 + $0x98] sm:$0xff]
    %v58 = vld [vmem:[#allocation3 + $0xa0] sm:$0xff]
    %v59 = vld [vmem:[#allocation3 + $0xa8] sm:$0xff]
    %v60 = vld [vmem:[#allocation3 + $0xb0] sm:$0xff]
    %v61 = vld [vmem:[#allocation3 + $0xb8] sm:$0xff]
    %v62 = vld [vmem:[#allocation3 + $0xc0] sm:$0xff]
    %v63 = vld [vmem:[#allocation3 + $0xc8] sm:$0xff]
    %v64 = vld [vmem:[#allocation3 + $0xd0] sm:$0xff]
    %v65 = vld [vmem:[#allocation3 + $0xd8] sm:$0xff]
    %v66 = vld [vmem:[#allocation3 + $0xe0] sm:$0xff]
    %v67 = vld [vmem:[#allocation3 + $0xe8] sm:$0xff]
    %v68 = vld [vmem:[#allocation3 + $0xf0] sm:$0xff]
    %v69 = vld [vmem:[#allocation3 + $0xf8] sm:$0xff]
    %v70 = vld [vmem:[#allocation3 + $0x100] sm:$0xff]
    %v71 = vld [vmem:[#allocation3 + $0x108] sm:$0xff]
    %v72 = vld [vmem:[#allocation3 + $0x110] sm:$0xff]
    %v73 = vld [vmem:[#allocation3 + $0x118] sm:$0xff]
    %v74 = vld [vmem:[#allocation3 + $0x120] sm:$0xff]
    %v75 = vld [vmem:[#allocation3 + $0x128] sm:$0xff]
    %v76 = vld [vmem:[#allocation3 + $0x130] sm:$0xff]
    %v77 = vld [vmem:[#allocation3 + $0x138] sm:$0xff]
    %v78 = vld [vmem:[#allocation3 + $0x140] sm:$0xff]
    %v79 = vld [vmem:[#allocation3 + $0x148] sm:$0xff]
    %v80 = vld [vmem:[#allocation3 + $0x150] sm:$0xff]
    %v81 = vld [vmem:[#allocation3 + $0x158] sm:$0xff]
    %v82 = vld [vmem:[#allocation3 + $0x160] sm:$0xff]
    %v83 = vld [vmem:[#allocation3 + $0x168] sm:$0xff]
    %v84 = vld [vmem:[#allocation3 + $0x170] sm:$0xff]
    %v85 = vld [vmem:[#allocation3 + $0x178] sm:$0xff]
    %v86 = vld [vmem:[#allocation3 + $0x180] sm:$0xff]
    %v87 = vld [vmem:[#allocation3 + $0x188] sm:$0xff]
    %v88 = vld [vmem:[#allocation3 + $0x190] sm:$0xff]
    %v89 = vld [vmem:[#allocation3 + $0x198] sm:$0xff]
    %v90 = vld [vmem:[#allocation3 + $0x1a0] sm:$0xff]
    %v91 = vld [vmem:[#allocation3 + $0x1a8] sm:$0xff]
    %v92 = vld [vmem:[#allocation3 + $0x1b0] sm:$0xff]
    %v93 = vld [vmem:[#allocation3 + $0x1b8] sm:$0xff]
    %v94 = vld [vmem:[#allocation3 + $0x1c0] sm:$0xff]
    %v95 = vld [vmem:[#allocation3 + $0x1c8] sm:$0xff]
    %v96 = vld [vmem:[#allocation3 + $0x1d0] sm:$0xff]
    %v97 = vld [vmem:[#allocation3 + $0x1d8] sm:$0xff]
    %v98 = vld [vmem:[#allocation3 + $0x1e0] sm:$0xff]
    %v99 = vld [vmem:[#allocation3 + $0x1e8] sm:$0xff]
    %v100 = vld [vmem:[#allocation3 + $0x1f0] sm:$0xff]
    %v101 = vld [vmem:[#allocation3 + $0x1f8] sm:$0xff]
    %v102 = vld [vmem:[#allocation3 + $0x200] sm:$0xff]
    %v103 = vld [vmem:[#allocation3 + $0x208] sm:$0xff]
    %v104 = vld [vmem:[#allocation3 + $0x210] sm:$0xff]
    %v105 = vld [vmem:[#allocation3 + $0x218] sm:$0xff]
    %v106 = vld [vmem:[#allocation3 + $0x220] sm:$0xff]
    %v107 = vld [vmem:[#allocation3 + $0x228] sm:$0xff]
    %v108 = vld [vmem:[#allocation3 + $0x230] sm:$0xff]
    %v109 = vld [vmem:[#allocation3 + $0x238] sm:$0xff]
    %v110 = vld [vmem:[#allocation3 + $0x240] sm:$0xff]
    %v111 = vld [vmem:[#allocation3 + $0x248] sm:$0xff]
    %v112 = vld [vmem:[#allocation3 + $0x250] sm:$0xff]
    %v113 = vld [vmem:[#allocation3 + $0x258] sm:$0xff]
    %v114 = vld [vmem:[#allocation3 + $0x260] sm:$0xff]
    %v115 = vld [vmem:[#allocation3 + $0x268] sm:$0xff]
    %v116 = vld [vmem:[#allocation3 + $0x270] sm:$0xff]
    %v117 = vld [vmem:[#allocation3 + $0x278] sm:$0xff]
    %v118 = vld [vmem:[#allocation3 + $0x280] sm:$0xff]
    %v119 = vld [vmem:[#allocation3 + $0x288] sm:$0xff]
    %v120 = vld [vmem:[#allocation3 + $0x290] sm:$0xff]
    %v121 = vld [vmem:[#allocation3 + $0x298] sm:$0xff]
    %v122 = vld [vmem:[#allocation3 + $0x2a0] sm:$0xff]
    %v123 = vld [vmem:[#allocation3 + $0x2a8] sm:$0xff]
    %v124 = vld [vmem:[#allocation3 + $0x2b0] sm:$0xff]
    %v125 = vld [vmem:[#allocation3 + $0x2b8] sm:$0xff]
    %v126 = vld [vmem:[#allocation3 + $0x2c0] sm:$0xff]
    %v127 = vld [vmem:[#allocation3 + $0x2c8] sm:$0xff]
    %v128 = vld [vmem:[#allocation3 + $0x2d0] sm:$0xff]
    %v129 = vld [vmem:[#allocation3 + $0x2d8] sm:$0xff]
    %v130 = vld [vmem:[#allocation3 + $0x2e0] sm:$0xff]
    %v131 = vld [vmem:[#allocation3 + $0x2e8] sm:$0xff]
    %v132 = vld [vmem:[#allocation3 + $0x2f0] sm:$0xff]
    %v133 = vld [vmem:[#allocation3 + $0x2f8] sm:$0xff]
    %v134 = vld [vmem:[#allocation3 + $0x300] sm:$0xff]
    %v135 = vld [vmem:[#allocation3 + $0x308] sm:$0xff]
    %v136 = vld [vmem:[#allocation3 + $0x310] sm:$0xff]
    %v137 = vld [vmem:[#allocation3 + $0x318] sm:$0xff]
    %v138 = vld [vmem:[#allocation3 + $0x320] sm:$0xff]
    %v139 = vld [vmem:[#allocation3 + $0x328] sm:$0xff]
    %v140 = vld [vmem:[#allocation3 + $0x330] sm:$0xff]
    %v141 = vld [vmem:[#allocation3 + $0x338] sm:$0xff]
    %v142 = vld [vmem:[#allocation3 + $0x340] sm:$0xff]
    %v143 = vld [vmem:[#allocation3 + $0x348] sm:$0xff]
    %v144 = vld [vmem:[#allocation3 + $0x350] sm:$0xff]
    %v145 = vld [vmem:[#allocation3 + $0x358] sm:$0xff]
    %v146 = vld [vmem:[#allocation3 + $0x360] sm:$0xff]
    %v147 = vld [vmem:[#allocation3 + $0x368] sm:$0xff]
    %v148 = vld [vmem:[#allocation3 + $0x370] sm:$0xff]
    %v149 = vld [vmem:[#allocation3 + $0x378] sm:$0xff]
    %v150 = vld [vmem:[#allocation3 + $0x380] sm:$0xff]
    %v151 = vld [vmem:[#allocation3 + $0x388] sm:$0xff]
    %v152 = vld [vmem:[#allocation3 + $0x390] sm:$0xff]
    %v153 = vld [vmem:[#allocation3 + $0x398] sm:$0xff]
    %v154 = vld [vmem:[#allocation3 + $0x3a0] sm:$0xff]
    %v155 = vld [vmem:[#allocation3 + $0x3a8] sm:$0xff]
    %v156 = vld [vmem:[#allocation3 + $0x3b0] sm:$0xff]
    %v157 = vld [vmem:[#allocation3 + $0x3b8] sm:$0xff]
    %v158 = vld [vmem:[#allocation3 + $0x3c0] sm:$0x1f]
    %v159 = vld [vmem:[#allocation3 + $0x3c8] sm:$0x1f]
    %v160 = vld [vmem:[#allocation3 + $0x3d0] sm:$0x1f]
    %v161 = vld [vmem:[#allocation3 + $0x3d8] sm:$0x1f]
    %v162 = vld [vmem:[%s2] sm:$0xff]
    %164 = vset.pattern.permute.xlu0 0
    %165 = vperm.xlu0 %164, %v162
    %v166 = vpop.permute.xlu0 %165
    %vm168 = vcmask 957440
    %v170 = vsel %vm168, %v37, 0
    %vm172 = vcmask 1044480
    %v174 = vsel %vm172, %v158, 0
    %v177 = vsel %vm172, %v159, 0
    %v180 = vsel %vm172, %v160, 0
    %v183 = vsel %vm172, %v161, 0
    %185 = vmatprep.subr.mxu0 %v99
    %186 = vmatpush1.msra.mxu0 %v98
    %187 = vmatprep.subr.mxu0 %v95
    %188 = vmatpush1.msra.mxu0 %v94
    %189 = vmatprep.subr.mxu0 %v91
    %190 = vmatpush1.msra.mxu0 %v90
    %191 = vmatprep.subr.mxu0 %v87
    %192 = vmatpush1.msra.mxu0 %v86
    %193 = vmatprep.subr.mxu0 %v83
    %194 = vmatpush1.msra.mxu0 %v82
    %195 = vmatprep.subr.mxu0 %v79
    %196 = vmatpush1.msra.mxu0 %v78
    %197 = vmatprep.subr.mxu0 %v75
    %198 = vmatpush1.msra.mxu0 %v74
    %199 = vmatprep.subr.mxu0 %v71
    %200 = vmatpush1.msra.mxu0 %v70
    %201 = vmatprep.subr.mxu0 %v67
    %202 = vmatpush1.msra.mxu0 %v66
    %203 = vmatprep.subr.mxu0 %v63
    %204 = vmatpush1.msra.mxu0 %v62
    %205 = vmatprep.subr.mxu0 %v59
    %206 = vmatpush1.msra.mxu0 %v58
    %207 = vmatprep.subr.mxu0 %v55
    %208 = vmatpush1.msra.mxu0 %v54
    %209 = vmatprep.subr.mxu0 %v51
    %210 = vmatpush1.msra.mxu0 %v50
    %211 = vmatprep.subr.mxu0 %v47
    %212 = vmatpush1.msra.mxu0 %v46
    %213 = vmatprep.subr.mxu0 %v43
    %214 = vmatpush1.msra.mxu0 %v42
    %215 = vmatprep.subr.mxu0 %v39
    %216 = vmatpush1.msra.mxu0 %v38
    %217 = vmatprep.subr.mxu0 0.0
    %218 = vmatpush2.msra.mxu0 0.0
    %219 = vmatprep.subr.mxu0 %v177
    %220 = vmatpush2.msra.mxu0 %v174
    %221 = vmatprep.subr.mxu0 %v155
    %222 = vmatpush2.msra.mxu0 %v154
    %223 = vmatprep.subr.mxu0 %v151
    %224 = vmatpush2.msra.mxu0 %v150
    %225 = vmatprep.subr.mxu0 %v147
    %226 = vmatpush2.msra.mxu0 %v146
    %227 = vmatprep.subr.mxu0 %v143
    %228 = vmatpush2.msra.mxu0 %v142
    %229 = vmatprep.subr.mxu0 %v139
    %230 = vmatpush2.msra.mxu0 %v138
    %231 = vmatprep.subr.mxu0 %v135
    %232 = vmatpush2.msra.mxu0 %v134
    %233 = vmatprep.subr.mxu0 %v131
    %234 = vmatpush2.msra.mxu0 %v130
    %235 = vmatprep.subr.mxu0 %v127
    %236 = vmatpush2.msra.mxu0 %v126
    %237 = vmatprep.subr.mxu0 %v123
    %238 = vmatpush2.msra.mxu0 %v122
    %239 = vmatprep.subr.mxu0 %v119
    %240 = vmatpush2.msra.mxu0 %v118
    %241 = vmatprep.subr.mxu0 %v115
    %242 = vmatpush2.msra.mxu0 %v114
    %243 = vmatprep.subr.mxu0 %v111
    %244 = vmatpush2.msra.mxu0 %v110
    %245 = vmatprep.subr.mxu0 %v107
    %246 = vmatpush2.msra.mxu0 %v106
    %247 = vmatprep.subr.mxu0 %v103
    %248 = vmatpush2.msra.mxu0 %v102
    %249 = vmatprep.mubr.f32.mxu0 %v170
    %250 = vmatmul.mubr.f32.gmra.mxu0 %v36
    %v251 = vpop.f32.mrf.mxu0
    %v252 = vadd.f32 %v166, %v251
    %v253 = vpop.f32.mrf.mxu0
    %v254 = vadd.f32 %v166, %v253
    %255 = vdwg.mxu0
    %256 = vmatprep.subr.mxu0 %v101
    %257 = vmatpush1.msra.mxu0 %v100
    %258 = vmatprep.subr.mxu0 %v97
    %259 = vmatpush1.msra.mxu0 %v96
    %260 = vmatprep.subr.mxu0 %v93
    %261 = vmatpush1.msra.mxu0 %v92
    %262 = vmatprep.subr.mxu0 %v89
    %263 = vmatpush1.msra.mxu0 %v88
    %264 = vmatprep.subr.mxu0 %v85
    %265 = vmatpush1.msra.mxu0 %v84
    %266 = vmatprep.subr.mxu0 %v81
    %267 = vmatpush1.msra.mxu0 %v80
    %268 = vmatprep.subr.mxu0 %v77
    %269 = vmatpush1.msra.mxu0 %v76
    %270 = vmatprep.subr.mxu0 %v73
    %271 = vmatpush1.msra.mxu0 %v72
    %272 = vmatprep.subr.mxu0 %v69
    %273 = vmatpush1.msra.mxu0 %v68
    %274 = vmatprep.subr.mxu0 %v65
    %275 = vmatpush1.msra.mxu0 %v64
    %276 = vmatprep.subr.mxu0 %v61
    %277 = vmatpush1.msra.mxu0 %v60
    %278 = vmatprep.subr.mxu0 %v57
    %279 = vmatpush1.msra.mxu0 %v56
    %280 = vmatprep.subr.mxu0 %v53
    %281 = vmatpush1.msra.mxu0 %v52
    %282 = vmatprep.subr.mxu0 %v49
    %283 = vmatpush1.msra.mxu0 %v48
    %284 = vmatprep.subr.mxu0 %v45
    %285 = vmatpush1.msra.mxu0 %v44
    %286 = vmatprep.subr.mxu0 %v41
    %287 = vmatpush1.msra.mxu0 %v40
    %288 = vmatprep.subr.mxu0 0.0
    %289 = vmatpush2.msra.mxu0 0.0
    %290 = vmatprep.subr.mxu0 %v183
    %291 = vmatpush2.msra.mxu0 %v180
    %292 = vmatprep.subr.mxu0 %v157
    %293 = vmatpush2.msra.mxu0 %v156
    %294 = vmatprep.subr.mxu0 %v153
    %295 = vmatpush2.msra.mxu0 %v152
    %296 = vmatprep.subr.mxu0 %v149
    %297 = vmatpush2.msra.mxu0 %v148
    %298 = vmatprep.subr.mxu0 %v145
    %299 = vmatpush2.msra.mxu0 %v144
    %300 = vmatprep.subr.mxu0 %v141
    %301 = vmatpush2.msra.mxu0 %v140
    %302 = vmatprep.subr.mxu0 %v137
    %303 = vmatpush2.msra.mxu0 %v136
    %304 = vmatprep.subr.mxu0 %v133
    %305 = vmatpush2.msra.mxu0 %v132
    %306 = vmatprep.subr.mxu0 %v129
    %307 = vmatpush2.msra.mxu0 %v128
    %308 = vmatprep.subr.mxu0 %v125
    %309 = vmatpush2.msra.mxu0 %v124
    %310 = vmatprep.subr.mxu0 %v121
    %311 = vmatpush2.msra.mxu0 %v120
    %312 = vmatprep.subr.mxu0 %v117
    %313 = vmatpush2.msra.mxu0 %v116
    %314 = vmatprep.subr.mxu0 %v113
    %315 = vmatpush2.msra.mxu0 %v112
    %316 = vmatprep.subr.mxu0 %v109
    %317 = vmatpush2.msra.mxu0 %v108
    %318 = vmatprep.subr.mxu0 %v105
    %319 = vmatpush2.msra.mxu0 %v104
    %320 = vmatprep.mubr.f32.mxu0 %v170
    %321 = vmatmul.mubr.f32.gmra.mxu0 %v36
    %v322 = vpop.f32.mrf.mxu0
    %v323 = vadd.f32 %v166, %v322
    %v324 = vpop.f32.mrf.mxu0
    %v325 = vadd.f32 %v166, %v324
    %326 = vdwg.mxu0
    %v327 = vmax.f32 %v252, 0.0
    %v328 = vmax.f32 %v254, 0.0
    %v329 = vmax.f32 %v323, 0.0
    %v330 = vmax.f32 %v325, 0.0
    %v331 = vld [vmem:[%s3] sm:$0xff]
    %333 = vset.pattern.permute.xlu0 0
    %334 = vperm.xlu0 %333, %v331
    %v335 = vpop.permute.xlu0 %334
    %v337 = vmul.f32 %v327, %v335
    %v338 = vmul.f32 %v328, %v335
    %v339 = vmul.f32 %v329, %v335
    %v340 = vmul.f32 %v330, %v335
    %v341 = vrot.slane %v337, 4
    %v342 = vadd.f32 %v337, %v341
    %v343 = vrot.slane %v342, 2
    %v344 = vadd.f32 %v342, %v343
    %v345 = vrot.slane %v344, 1
    %v346 = vadd.f32 %v344, %v345
    %v347 = vrot.slane %v338, 4
    %v348 = vadd.f32 %v338, %v347
    %v349 = vrot.slane %v348, 2
    %v350 = vadd.f32 %v348, %v349
    %v351 = vrot.slane %v350, 1
    %v352 = vadd.f32 %v350, %v351
    %v353 = vrot.slane %v339, 4
    %v354 = vadd.f32 %v339, %v353
    %v355 = vrot.slane %v354, 2
    %v356 = vadd.f32 %v354, %v355
    %v357 = vrot.slane %v356, 1
    %v358 = vadd.f32 %v356, %v357
    %v359 = vrot.slane %v340, 4
    %v360 = vadd.f32 %v340, %v359
    %v361 = vrot.slane %v360, 2
    %v362 = vadd.f32 %v360, %v361
    %v363 = vrot.slane %v362, 1
    %v364 = vadd.f32 %v362, %v363
    %s365 = sld [smem:[#allocation2]]
    %v366 = vstv %s365
    %v367 = vadd.f32 %v346, %v366
    %v368 = vadd.f32 %v352, %v366
    %v369 = vadd.f32 %v358, %v366
    %v370 = vadd.f32 %v364, %v366
    %v375 = vcombine.low %v367, %v368
    %v376 = vcombine.low %v369, %v370
    %v378 = vunpack.c.l.s4 1966171168
    %v379 = vunpack.c.0.s8 %v378
    %v380 = vlaneseq
    %v381 = vshrl.u32 %v380, 7
    %v382 = vsub.s32 %v379, %v381
    %v383 = vrot.slane %v375, %v382
    %v385 = vunpack.c.l.s4 1966171168
    %v386 = vunpack.c.0.s8 %v385
    %v387 = vlaneseq
    %v388 = vshrl.u32 %v387, 7
    %v389 = vsub.s32 %v386, %v388
    %v390 = vrot.slane %v376, %v389
    %v391 = vcombine.low %v383, %v390
    %v393 = vunpack.c.l.s4 1966171168
    %v394 = vunpack.c.0.s8 %v393
    %v395 = vlaneseq
    %v396 = vshrl.u32 %v395, 7
    %v397 = vsub.s32 %v394, %v396
    %v398 = vrot.slane %v391, %v397
    %v400 = vlaneseq
    %vm401 = vcmp.ge.s32.totalorder %v400, 0
    %vm402 = vcmp.lt.s32.totalorder %v400, 512
    %vm403 = vmand %vm401, %vm402
    %404 = vst.msk [vmem:[#allocation6] sm:$0xf] %vm403, %v398
    // Predicated region
    $region26: #{tpu_custom_call.1} parent=1 // pred_check
      _
    $region27: #{tpu_custom_call.1} parent=1 // pred_check_branch
      %406 = sbr.rel (0) target = $region29
    $region28: #{tpu_custom_call.1} parent=1 // pred_region
      %s408 = ssub.s32 64, 64
      %409 = vsyncadd [#allocation5], %s408
      %s411 = sshll.u32 [#allocation6], 4
      %s412 = int_to_ptr.vmem [resolvable:$true] %s411
      %414 = dma.vmem_to_hbm [thread:$0]  %s412, 64, %s5, [#allocation5]
    $region29: #{tpu_custom_call.1} parent=1 // pred_fallthru
      _
    // Predicated region
    $region30: #{tpu_custom_call.1} parent=1 // pred_check
      _
    $region31: #{tpu_custom_call.1} parent=1 // pred_check_branch
      %416 = sbr.rel (0) target = $region33
    $region32: #{tpu_custom_call.1} parent=1 // pred_region
      %417 = dma.done [#allocation5], 64
    $region33: #{tpu_custom_call.1} parent=1 // pred_fallthru
      _
    %418 = vsyncpa [#allocation4], 1
    %419 = vsyncpa [#allocation5], 1

</llo_original>
